<compile_context>
chip_gen: v5e
topology: v5e:2x2
jax: 0.10.0
libtpu: 0.0.40
codegen_flags: <defaults>
</compile_context>

<pallas_src>
import jax
import jax.numpy as jnp
from jax.experimental import pallas as pl
from jax.experimental.pallas import tpu as pltpu


def _flow_cost_kernel(src_ref, pred_ref, xmask_ref, ymask_ref, w_ref, out_ref):
    """One batch-block per grid step.

    src_ref   : (Bb, Ls, D)   h_x block
    pred_ref  : (Bb, Lp, D)   h_y block
    xmask_ref : (Bb, 1,  Ls)  src mask, broadcast-ready over lanes (j axis)
    ymask_ref : (Bb, Lp, 1)   pred mask, broadcast-ready over sublanes (i axis)
    w_ref     : (D, D)        biaffine weight (resident across grid steps)
    out_ref   : (Bb, 1, 128)  per-batch flow-cost sum, lane-replicated
    """
    src = src_ref[...]
    pred = pred_ref[...]
    sm = xmask_ref[...]
    pm = ymask_ref[...]
    w = w_ref[...]

    Bb, Lp, D = pred.shape
    f32 = jnp.float32

    # --- L2 cost via the Gram-matrix identity (MXU), no (Lp, Ls, D) tensor ---
    #   ||src_j - pred_i||^2 = ||pred_i||^2 + ||src_j||^2 - 2 * (pred_i . src_j)
    g = jnp.einsum('bid,bjd->bij', pred, src,
                   preferred_element_type=f32)                   # (Bb, Lp, Ls)
    p_sq = jnp.sum(pred * pred, axis=-1, keepdims=True)          # (Bb, Lp, 1)
    # src row norms produced directly in (Bb, 1, Ls) layout (j on lanes) via a
    # ones-matvec so no sublane<->lane relayout is needed before broadcasting.
    ones_row = jnp.ones((Bb, 1, D), dtype=f32)
    s_sq = jnp.einsum('bkd,bjd->bkj', ones_row, src * src,
                      preferred_element_type=f32)                # (Bb, 1, Ls)
    cost = jnp.sqrt(jnp.maximum(p_sq + s_sq - 2.0 * g, 0.0))     # (Bb, Lp, Ls)

    # --- biaffine transport scores on the MXU, reusing the resident tiles ---
    # tr[b,i,j] = pred[b,i] @ W @ src[b,j]
    # (For large Bb*Lp a single (Bb*Lp, D) @ (D, D) matmul would be fatter; the
    #  broadcast-batched form keeps lowering simple and is free at these sizes.)
    w_b = jnp.broadcast_to(w[None, :, :], (Bb, D, D))
    pw = jnp.einsum('bid,bde->bie', pred, w_b,
                    preferred_element_type=f32)                  # (Bb, Lp, D)
    tr = jnp.einsum('bie,bje->bij', pw, src,
                    preferred_element_type=f32)                  # (Bb, Lp, Ls)

    # --- masked softmax over src positions, folded with the cost sum so the
    #     (Bb, Lp, Ls) prob matrix is never materialized ---
    cmask = pm * sm                                              # (Bb, Lp, Ls)
    tr = jnp.where(cmask == 0.0, f32(-10000000000.0), tr)
    m = jnp.max(tr, axis=-1, keepdims=True)
    e = jnp.exp(tr - m)
    denom = jnp.sum(e, axis=-1, keepdims=True)                   # (Bb, Lp, 1)
    row_flow = jnp.sum(e * cost, axis=-1, keepdims=True)         # (Bb, Lp, 1)
    per_row = row_flow * pl.reciprocal(denom, approx=True)       # EUP slot
    s = jnp.sum(per_row, axis=1, keepdims=True)                  # (Bb, 1, 1)

    out_ref[...] = jnp.broadcast_to(s, out_ref.shape).astype(jnp.float32)


def _choose_batch_block(B):
    # One fat grid step when the batch is small (per-step overhead ~0.35 us);
    # otherwise 8-batch blocks (sublane-aligned second-minor dims, and an even
    # grid so v7x's two TensorCores both get work via "parallel" semantics).
    if B <= 8 or B % 8 != 0:
        return B
    return 8


def _per_batch_flow_cost(h_x, h_y, src_mask, pred_mask, w):
    B, Ls, D = h_x.shape
    _, Lp, _ = h_y.shape
    b_block = _choose_batch_block(B)
    grid = (B // b_block,)

    # Reshape masks in the (free) XLA wrapper into broadcast-ready layouts so
    # the kernel never needs a lane<->sublane relayout.
    xm = src_mask.reshape(B, 1, Ls).astype(jnp.float32)
    ym = pred_mask.reshape(B, Lp, 1).astype(jnp.float32)

    out = pl.pallas_call(
        _flow_cost_kernel,
        out_shape=jax.ShapeDtypeStruct((B, 1, 128), jnp.float32),
        grid_spec=pltpu.PrefetchScalarGridSpec(
            num_scalar_prefetch=0,
            grid=grid,
            in_specs=[
                pl.BlockSpec((b_block, Ls, D), lambda g: (g, 0, 0)),   # h_x
                pl.BlockSpec((b_block, Lp, D), lambda g: (g, 0, 0)),   # h_y
                pl.BlockSpec((b_block, 1, Ls), lambda g: (g, 0, 0)),   # src mask
                pl.BlockSpec((b_block, Lp, 1), lambda g: (g, 0, 0)),   # pred mask
                pl.BlockSpec((D, D), lambda g: (0, 0)),                # W resident
            ],
            out_specs=pl.BlockSpec((b_block, 1, 128), lambda g: (g, 0, 0)),
        ),
        compiler_params=pltpu.CompilerParams(
            dimension_semantics=("parallel",),
            # Explicit VMEM budget (working set here is << 1 MiB; 32 MiB is
            # safe on v5e/v6e (128 MiB) and v7x (64 MiB physical)).
            vmem_limit_bytes=32 * 1024 * 1024,
        ),
    )(h_x, h_y, xm, ym, w)
    return out[:, 0, 0]          # (B,)  sum over (Lp, Ls) of tr_prob * cost_mx


def semantic_similarity_forward(h_x, h_y, x_mask, y_mask, w, lambda_w,
                                reduction=True):
    """JAX/Pallas equivalent of SemanticSimilarityMeasure.forward."""
    B = h_x.shape[0]
    src_mask = x_mask[:, :h_x.shape[1]]
    pred_mask = y_mask[:, :h_y.shape[1]]

    sum_flow = _per_batch_flow_cost(h_x, h_y, src_mask, pred_mask, w)  # (B,)

    if reduction:
        nL1 = jnp.sum(pred_mask, axis=-1, keepdims=True)   # (B, 1)
        nL2 = jnp.sum(src_mask, axis=-1, keepdims=True)    # (B, 1)
        # Reproduce torch broadcasting exactly: (B,1,1) / (B,1) -> (B,B,1)
        fc = sum_flow.reshape(B, 1, 1) / (nL1 * nL2)
        fc = jnp.mean(fc)
    else:
        fc = sum_flow.reshape(B, 1, 1)     # sum over dims (1,2), keepdim=True
        fc = jnp.squeeze(fc, axis=-1)      # .squeeze(dim=-1) -> (B, 1)
    return fc * lambda_w


def _reference(h_x, h_y, x_mask, y_mask, w, lambda_w):
    """Pure-JAX reference mirroring the PyTorch semantics (reduction=True)."""
    src, pred = h_x, h_y
    src_mask = x_mask[:, :src.shape[1]]
    pred_mask = y_mask[:, :pred.shape[1]]
    cost_mx = jnp.linalg.norm(src[:, None, :, :] - pred[:, :, None, :], axis=-1)
    cost_mask = src_mask[:, None, :] * pred_mask[:, :, None]
    tr_mx = jnp.einsum('bid,de,bje->bij', pred, w, src)
    tr_mx = jnp.where(cost_mask == 0, -10000000000.0, tr_mx)
    tr_prob = jax.nn.softmax(tr_mx, axis=-1)
    flow_cost = tr_prob * cost_mx
    nL1 = jnp.sum(pred_mask, axis=-1, keepdims=True)
    nL2 = jnp.sum(src_mask, axis=-1, keepdims=True)
    fc = jnp.sum(flow_cost, axis=(1, 2), keepdims=True) / (nL1 * nL2)  # (B,B,1)
    return jnp.mean(fc) * lambda_w


if __name__ == "__main__":
    B, Ls, Lp, D = 2, 8, 8, 32        # rel_size = tgt_mlp_dims[-1] = 32
    lambda_w = 0.5                    # options['lambda']

    key = jax.random.PRNGKey(0)
    k1, k2 = jax.random.split(key)
    h_x = jax.random.normal(k1, (B, Ls, D), dtype=jnp.float32)
    h_y = jax.random.normal(k2, (B, Lp, D), dtype=jnp.float32)

    x_len = jnp.array([8, 5])
    y_len = jnp.array([8, 6])
    x_mask = (jnp.arange(Ls)[None, :] < x_len[:, None]).astype(jnp.float32)
    y_mask = (jnp.arange(Lp)[None, :] < y_len[:, None]).astype(jnp.float32)

    # BiAffine weight (n_label=1, no biases), deterministically init to 1.0
    w = jnp.ones((D, D), dtype=jnp.float32)

    out = semantic_similarity_forward(h_x, h_y, x_mask, y_mask, w, lambda_w,
                                      reduction=True)
    out = jax.block_until_ready(out)

    ref = _reference(h_x, h_y, x_mask, y_mask, w, lambda_w)
    # Tolerance accounts for the Gram-matrix cost formulation and the EUP
    # approximate reciprocal used for the softmax denominator.
    assert jnp.allclose(out, ref, rtol=5e-3, atol=1e-3), (out, ref)
    print("KERNEL_OK")
</pallas_src>

<mosaic_0001>
module attributes {stable_mosaic.version = 11 : i64} {
  func.func @_flow_cost_kernel(%arg0: i32, %arg1: memref<2x8x32xf32, #tpu.memory_space<vmem>>, %arg2: memref<2x8x32xf32, #tpu.memory_space<vmem>>, %arg3: memref<2x1x8xf32, #tpu.memory_space<vmem>>, %arg4: memref<2x8x1xf32, #tpu.memory_space<vmem>>, %arg5: memref<32x32xf32, #tpu.memory_space<vmem>>, %arg6: memref<2x1x128xf32, #tpu.memory_space<vmem>>) attributes {dimension_semantics = [#tpu.dimension_semantics<parallel>], iteration_bounds = array<i64: 1>, scalar_prefetch = 0 : i64, scratch_operands = 0 : i64, tpu.core_type = #tpu.core_type<tc>, window_params = [{transform_indices = @transform_0, window_bounds = array<i64: 2, 8, 32>}, {transform_indices = @transform_1, window_bounds = array<i64: 2, 8, 32>}, {transform_indices = @transform_2, window_bounds = array<i64: 2, 1, 8>}, {transform_indices = @transform_3, window_bounds = array<i64: 2, 8, 1>}, {pipeline_mode = #tpu.pipeline_mode<synchronous>, transform_indices = @transform_4, window_bounds = array<i64: 32, 32>}, {transform_indices = @transform_5, window_bounds = array<i64: 2, 1, 128>}]} {
    %c0 = arith.constant 0 : index
    %c0_0 = arith.constant 0 : index
    %c0_1 = arith.constant 0 : index
    %0 = vector.load %arg1[%c0, %c0_0, %c0_1] : memref<2x8x32xf32, #tpu.memory_space<vmem>>, vector<2x8x32xf32>
    %c0_2 = arith.constant 0 : index
    %c0_3 = arith.constant 0 : index
    %c0_4 = arith.constant 0 : index
    %1 = vector.load %arg2[%c0_2, %c0_3, %c0_4] : memref<2x8x32xf32, #tpu.memory_space<vmem>>, vector<2x8x32xf32>
    %c0_5 = arith.constant 0 : index
    %c0_6 = arith.constant 0 : index
    %c0_7 = arith.constant 0 : index
    %2 = vector.load %arg3[%c0_5, %c0_6, %c0_7] : memref<2x1x8xf32, #tpu.memory_space<vmem>>, vector<2x1x8xf32>
    %c0_8 = arith.constant 0 : index
    %c0_9 = arith.constant 0 : index
    %c0_10 = arith.constant 0 : index
    %3 = vector.load %arg4[%c0_8, %c0_9, %c0_10] : memref<2x8x1xf32, #tpu.memory_space<vmem>>, vector<2x8x1xf32>
    %c0_11 = arith.constant 0 : index
    %c0_12 = arith.constant 0 : index
    %4 = vector.load %arg5[%c0_11, %c0_12] : memref<32x32xf32, #tpu.memory_space<vmem>>, vector<32x32xf32>
    "tpu.trace_start"() <{level = 10 : i32, message = "bid,bjd->bij"}> : () -> ()
    %cst = arith.constant dense<0.000000e+00> : vector<2x8x8xf32>
    %5 = tpu.matmul %1, %0, %cst {dimension_numbers = #tpu.dot_dimension_numbers<[2], [2], [1], [1], [0, 0, 0, 1, 1, 1], [0], [0]>} : vector<2x8x32xf32>, vector<2x8x32xf32>, vector<2x8x8xf32> -> vector<2x8x8xf32>
    "tpu.trace_stop"() : () -> ()
    %6 = arith.mulf %1, %1 : vector<2x8x32xf32>
    %cst_13 = arith.constant dense<0.000000e+00> : vector<2x8xf32>
    %7 = vector.multi_reduction <add>, %6, %cst_13 [2] : vector<2x8x32xf32> to vector<2x8xf32>
    %8 = vector.shape_cast %7 : vector<2x8xf32> to vector<2x8x1xf32>
    %cst_14 = arith.constant 1.000000e+00 : f32
    %9 = vector.broadcast %cst_14 : f32 to vector<2x1x32xf32>
    %10 = arith.mulf %0, %0 : vector<2x8x32xf32>
    "tpu.trace_start"() <{level = 10 : i32, message = "bkd,bjd->bkj"}> : () -> ()
    %cst_15 = arith.constant dense<0.000000e+00> : vector<2x1x8xf32>
    %11 = tpu.matmul %9, %10, %cst_15 {dimension_numbers = #tpu.dot_dimension_numbers<[2], [2], [1], [1], [0, 0, 0, 1, 1, 1], [0], [0]>} : vector<2x1x32xf32>, vector<2x8x32xf32>, vector<2x1x8xf32> -> vector<2x1x8xf32>
    "tpu.trace_stop"() : () -> ()
    %12 = vector.broadcast %8 : vector<2x8x1xf32> to vector<2x8x8xf32>
    %13 = vector.broadcast %11 : vector<2x1x8xf32> to vector<2x8x8xf32>
    %14 = arith.addf %12, %13 : vector<2x8x8xf32>
    %cst_16 = arith.constant 2.000000e+00 : f32
    %15 = vector.broadcast %cst_16 : f32 to vector<2x8x8xf32>
    %16 = arith.mulf %15, %5 : vector<2x8x8xf32>
    %17 = arith.subf %14, %16 : vector<2x8x8xf32>
    %cst_17 = arith.constant 0.000000e+00 : f32
    %18 = vector.broadcast %cst_17 : f32 to vector<2x8x8xf32>
    %19 = arith.maximumf %17, %18 : vector<2x8x8xf32>
    %20 = math.sqrt %19 : vector<2x8x8xf32>
    %21 = vector.shape_cast %4 : vector<32x32xf32> to vector<1x32x32xf32>
    %22 = vector.shape_cast %21 : vector<1x32x32xf32> to vector<1x32x32xf32>
    %23 = vector.broadcast %22 : vector<1x32x32xf32> to vector<2x32x32xf32>
    "tpu.trace_start"() <{level = 10 : i32, message = "bid,bde->bie"}> : () -> ()
    %cst_18 = arith.constant dense<0.000000e+00> : vector<2x8x32xf32>
    %24 = tpu.matmul %1, %23, %cst_18 {dimension_numbers = #tpu.dot_dimension_numbers<[2], [1], [1], [2], [0, 0, 0, 1, 1, 2], [0], [0]>} : vector<2x8x32xf32>, vector<2x32x32xf32>, vector<2x8x32xf32> -> vector<2x8x32xf32>
    "tpu.trace_stop"() : () -> ()
    "tpu.trace_start"() <{level = 10 : i32, message = "bie,bje->bij"}> : () -> ()
    %cst_19 = arith.constant dense<0.000000e+00> : vector<2x8x8xf32>
    %25 = tpu.matmul %24, %0, %cst_19 {dimension_numbers = #tpu.dot_dimension_numbers<[2], [2], [1], [1], [0, 0, 0, 1, 1, 1], [0], [0]>} : vector<2x8x32xf32>, vector<2x8x32xf32>, vector<2x8x8xf32> -> vector<2x8x8xf32>
    "tpu.trace_stop"() : () -> ()
    %26 = vector.broadcast %3 : vector<2x8x1xf32> to vector<2x8x8xf32>
    %27 = vector.broadcast %2 : vector<2x1x8xf32> to vector<2x8x8xf32>
    %28 = arith.mulf %26, %27 : vector<2x8x8xf32>
    %cst_20 = arith.constant 0.000000e+00 : f32
    %29 = vector.broadcast %cst_20 : f32 to vector<2x8x8xf32>
    %30 = arith.cmpf oeq, %28, %29 : vector<2x8x8xf32>
    %cst_21 = arith.constant -1.000000e+10 : f32
    %31 = vector.broadcast %cst_21 : f32 to vector<2x8x8xf32>
    %32 = arith.select %30, %31, %25 : vector<2x8x8xi1>, vector<2x8x8xf32>
    %cst_22 = arith.constant dense<0xFF800000> : vector<2x8xf32>
    %33 = vector.multi_reduction <maximumf>, %32, %cst_22 [2] : vector<2x8x8xf32> to vector<2x8xf32>
    %34 = vector.shape_cast %33 : vector<2x8xf32> to vector<2x8x1xf32>
    %35 = vector.broadcast %34 : vector<2x8x1xf32> to vector<2x8x8xf32>
    %36 = arith.subf %32, %35 : vector<2x8x8xf32>
    %37 = math.exp %36 : vector<2x8x8xf32>
    %cst_23 = arith.constant dense<0.000000e+00> : vector<2x8xf32>
    %38 = vector.multi_reduction <add>, %37, %cst_23 [2] : vector<2x8x8xf32> to vector<2x8xf32>
    %39 = vector.shape_cast %38 : vector<2x8xf32> to vector<2x8x1xf32>
    %40 = arith.mulf %37, %20 : vector<2x8x8xf32>
    %cst_24 = arith.constant dense<0.000000e+00> : vector<2x8xf32>
    %41 = vector.multi_reduction <add>, %40, %cst_24 [2] : vector<2x8x8xf32> to vector<2x8xf32>
    %42 = vector.shape_cast %41 : vector<2x8xf32> to vector<2x8x1xf32>
    %43 = tpu.reciprocal %39 {approx = true} : vector<2x8x1xf32> -> vector<2x8x1xf32>
    %44 = arith.mulf %42, %43 : vector<2x8x1xf32>
    %cst_25 = arith.constant dense<0.000000e+00> : vector<2x1xf32>
    %45 = vector.multi_reduction <add>, %44, %cst_25 [1] : vector<2x8x1xf32> to vector<2x1xf32>
    %46 = vector.shape_cast %45 : vector<2x1xf32> to vector<2x1x1xf32>
    %47 = vector.shape_cast %46 : vector<2x1x1xf32> to vector<2x1x1xf32>
    %48 = vector.broadcast %47 : vector<2x1x1xf32> to vector<2x1x128xf32>
    %c0_26 = arith.constant 0 : index
    %c0_27 = arith.constant 0 : index
    %c0_28 = arith.constant 0 : index
    %49 = vector.load %arg6[%c0_26, %c0_27, %c0_28] : memref<2x1x128xf32, #tpu.memory_space<vmem>>, vector<2x1x128xf32>
    tpu.vector_store %arg6[%c0_26, %c0_27, %c0_28], %48 {strides = array<i32>} : memref<2x1x128xf32, #tpu.memory_space<vmem>>, vector<2x1x128xf32>,
    return
  }
  func.func @transform_0(%arg0: i32) -> (i32, i32, i32) {
    %c0_i32 = arith.constant 0 : i32
    %c0_i32_0 = arith.constant 0 : i32
    %c0_i32_1 = arith.constant 0 : i32
    return %arg0, %c0_i32, %c0_i32_0 : i32, i32, i32
  }
  func.func @transform_1(%arg0: i32) -> (i32, i32, i32) {
    %c0_i32 = arith.constant 0 : i32
    %c0_i32_0 = arith.constant 0 : i32
    %c0_i32_1 = arith.constant 0 : i32
    return %arg0, %c0_i32, %c0_i32_0 : i32, i32, i32
  }
  func.func @transform_2(%arg0: i32) -> (i32, i32, i32) {
    %c0_i32 = arith.constant 0 : i32
    %c0_i32_0 = arith.constant 0 : i32
    %c0_i32_1 = arith.constant 0 : i32
    return %arg0, %c0_i32, %c0_i32_0 : i32, i32, i32
  }
  func.func @transform_3(%arg0: i32) -> (i32, i32, i32) {
    %c0_i32 = arith.constant 0 : i32
    %c0_i32_0 = arith.constant 0 : i32
    %c0_i32_1 = arith.constant 0 : i32
    return %arg0, %c0_i32, %c0_i32_0 : i32, i32, i32
  }
  func.func @transform_4(%arg0: i32) -> (i32, i32) {
    %c0_i32 = arith.constant 0 : i32
    %c0_i32_0 = arith.constant 0 : i32
    %c0_i32_1 = arith.constant 0 : i32
    return %c0_i32, %c0_i32_0 : i32, i32
  }
  func.func @transform_5(%arg0: i32) -> (i32, i32, i32) {
    %c0_i32 = arith.constant 0 : i32
    %c0_i32_0 = arith.constant 0 : i32
    %c0_i32_1 = arith.constant 0 : i32
    return %arg0, %c0_i32, %c0_i32_0 : i32, i32, i32
  }
}

</mosaic_0001>

<llo_original>
// kernel: tpu_custom_call.1
$region0: #{tpu_custom_call.1}
  #allocation0 [shape = 'u32[]', space=smem, size = 0x4, offset = 0x4, fixed_abs, tag = 'smem constant byte address 0x4 - core index']
  #allocation1 [shape = 'u32[72,128]{1,0:T(1,128)}', space=vmem, size = 0x9000, scoped, tag = 'internal scratch']
  %s0 = inlined_call_operand.vmem [shape: f32[2,8,32], index: 0, kind: input, shape index: {}]
  %s1 = inlined_call_operand.hbm [shape: f32[2,8,32], index: 1, kind: input, shape index: {}]
  %s2 = inlined_call_operand.vmem [shape: f32[2,1,8], index: 2, kind: input, shape index: {}]
  %s3 = inlined_call_operand.vmem [shape: f32[2,8,1], index: 3, kind: input, shape index: {}]
  %s4 = inlined_call_operand.hbm [shape: f32[32,32], index: 4, kind: input, shape index: {}]
  %s5 = inlined_call_operand.hbm [shape: f32[2,1,128], index: 5, kind: output, shape index: {}]
  %s6 = sld [smem:[#allocation0]]
  $region38: #{tpu_custom_call.1} parent=0
    _
  %s8 = ssub.s32 1, %s6
  %s9 = scalar_select 0, %s8, %s6
  $region1: #{tpu_custom_call.1} parent=0
    #allocation2 [shape = 'u8[8192]{0}', space=vmem, size = 0x2000, scoped, tag = 'input window, operand 1, single buffered']
    #allocation3 [shape = 's32[1]{0}', space=sflag, size = 0x4, scoped, tag = 'scoped memory for tpu_custom_call.1']
    #allocation4 [shape = 's32[1]{0}', space=sflag, size = 0x4, scoped, tag = 'scoped memory for tpu_custom_call.1']
    #allocation5 [shape = 'u8[16384]{0}', space=vmem, size = 0x4000, scoped, tag = 'input window, operand 4, single buffered']
    #allocation6 [shape = 's32[1]{0}', space=sflag, size = 0x4, scoped, tag = 'scoped memory for tpu_custom_call.1']
    #allocation7 [shape = 'u8[1024]{0}', space=vmem, size = 0x400, scoped, tag = 'output window, operand 0, single buffered']
    %10 = vsyncpa [#allocation3], 0
    %11 = vsyncpa [#allocation6], 0
    %12 = vsyncpa [#allocation4], 0
    // Predicated region
    $region2: #{tpu_custom_call.1} parent=1 // pred_check
      _
    $region3: #{tpu_custom_call.1} parent=1 // pred_check_branch
      %14 = sbr.rel (0) target = $region5
    $region4: #{tpu_custom_call.1} parent=1 // pred_region
      _
    $region5: #{tpu_custom_call.1} parent=1 // pred_fallthru
      _
    // Predicated region
    $region6: #{tpu_custom_call.1} parent=1 // pred_check
      _
    $region7: #{tpu_custom_call.1} parent=1 // pred_check_branch
      %16 = sbr.rel (0) target = $region9
    $region8: #{tpu_custom_call.1} parent=1 // pred_region
      %18 = vsyncadd [#allocation3], 0
      %s19 = sshll.u32 %s1, 4
      %s20 = int_to_ptr.hbm [resolvable:$true] %s19
      %s21 = sshll.u32 [#allocation2], 4
      %s22 = int_to_ptr.vmem [resolvable:$true] %s21
      %27 = dma.hbm_to_vmem [thread:$0]  %s20, 256, %s22, [#allocation3], 128, 128, 8
    $region9: #{tpu_custom_call.1} parent=1 // pred_fallthru
      _
    // Predicated region
    $region10: #{tpu_custom_call.1} parent=1 // pred_check
      _
    $region11: #{tpu_custom_call.1} parent=1 // pred_check_branch
      %29 = sbr.rel (0) target = $region13
    $region12: #{tpu_custom_call.1} parent=1 // pred_region
      _
    $region13: #{tpu_custom_call.1} parent=1 // pred_fallthru
      _
    // Predicated region
    $region14: #{tpu_custom_call.1} parent=1 // pred_check
      _
    $region15: #{tpu_custom_call.1} parent=1 // pred_check_branch
      %31 = sbr.rel (0) target = $region17
    $region16: #{tpu_custom_call.1} parent=1 // pred_region
      _
    $region17: #{tpu_custom_call.1} parent=1 // pred_fallthru
      _
    // Predicated region
    $region18: #{tpu_custom_call.1} parent=1 // pred_check
      _
    $region19: #{tpu_custom_call.1} parent=1 // pred_check_branch
      %33 = sbr.rel (0) target = $region21
    $region20: #{tpu_custom_call.1} parent=1 // pred_region
      %35 = vsyncadd [#allocation6], 0
      %s36 = sshll.u32 %s4, 4
      %s37 = int_to_ptr.hbm [resolvable:$true] %s36
      %s38 = sshll.u32 [#allocation5], 4
      %s39 = int_to_ptr.vmem [resolvable:$true] %s38
      %44 = dma.hbm_to_vmem [thread:$0]  %s37, 512, %s39, [#allocation6], 128, 128, 8
    $region21: #{tpu_custom_call.1} parent=1 // pred_fallthru
      _
    // Predicated region
    $region22: #{tpu_custom_call.1} parent=1 // pred_check
      _
    $region23: #{tpu_custom_call.1} parent=1 // pred_check_branch
      %46 = sbr.rel (0) target = $region25
    $region24: #{tpu_custom_call.1} parent=1 // pred_region
      %48 = dma.done [#allocation3], 256
    $region25: #{tpu_custom_call.1} parent=1 // pred_fallthru
      _
    // Predicated region
    $region26: #{tpu_custom_call.1} parent=1 // pred_check
      _
    $region27: #{tpu_custom_call.1} parent=1 // pred_check_branch
      %50 = sbr.rel (0) target = $region29
    $region28: #{tpu_custom_call.1} parent=1 // pred_region
      %52 = dma.done [#allocation6], 512
    $region29: #{tpu_custom_call.1} parent=1 // pred_fallthru
      _
    %v53 = vld [vmem:[%s0] sm:$0xff]
    %v54 = vld [vmem:[%s0 + $0x8] sm:$0xff]
    %v55 = vld [vmem:[#allocation2] sm:$0xff]
    %v56 = vld [vmem:[#allocation2 + $0x8] sm:$0xff]
    %v57 = vld [vmem:[%s2] sm:$0x1]
    %v58 = vld [vmem:[%s2 + $0x1] sm:$0x1]
    %v59 = vld [vmem:[%s3] sm:$0xff]
    %v60 = vld [vmem:[%s3 + $0x8] sm:$0xff]
    %v61 = vld [vmem:[#allocation5] sm:$0xff]
    %v62 = vld [vmem:[#allocation5 + $0x8] sm:$0xff]
    %v63 = vld [vmem:[#allocation5 + $0x10] sm:$0xff]
    %v64 = vld [vmem:[#allocation5 + $0x18] sm:$0xff]
    %vm65 = vcmask 261120
    %v67 = vsel %vm65, %v55, 0
    %v70 = vsel %vm65, %v53, 0
    %72 = vmatpush.xpose.msra.mxu0 0.0
    %73 = vmatpush.xpose.msra.mxu0 0.0
    %74 = vmatpush.xpose.msra.mxu0 0.0
    %75 = vmatpush.xpose.msra.mxu0 0.0
    %76 = vmatpush.xpose.msra.mxu0 0.0
    %77 = vmatpush.xpose.msra.mxu0 0.0
    %78 = vmatpush.xpose.msra.mxu0 0.0
    %79 = vmatpush.xpose.msra.mxu0 0.0
    %80 = vmatpush.xpose.msra.mxu0 0.0
    %81 = vmatpush.xpose.msra.mxu0 0.0
    %82 = vmatpush.xpose.msra.mxu0 0.0
    %83 = vmatpush.xpose.msra.mxu0 0.0
    %84 = vmatpush.xpose.msra.mxu0 0.0
    %85 = vmatpush.xpose.msra.mxu0 0.0
    %86 = vmatpush.xpose.msra.mxu0 0.0
    %87 = vmatpush.xpose.msra.mxu0 %v70
    %88 = vmatmul.f32.gmra.mxu0 %v67
    %v89 = vpop.f32.mrf.mxu0
    %v90 = vadd.f32 0.0, %v89
    %91 = vdwg.mxu0
    %v93 = vsel %vm65, %v56, 0
    %v96 = vsel %vm65, %v54, 0
    %98 = vmatpush.xpose.msra.mxu0 0.0
    %99 = vmatpush.xpose.msra.mxu0 0.0
    %100 = vmatpush.xpose.msra.mxu0 0.0
    %101 = vmatpush.xpose.msra.mxu0 0.0
    %102 = vmatpush.xpose.msra.mxu0 0.0
    %103 = vmatpush.xpose.msra.mxu0 0.0
    %104 = vmatpush.xpose.msra.mxu0 0.0
    %105 = vmatpush.xpose.msra.mxu0 0.0
    %106 = vmatpush.xpose.msra.mxu0 0.0
    %107 = vmatpush.xpose.msra.mxu0 0.0
    %108 = vmatpush.xpose.msra.mxu0 0.0
    %109 = vmatpush.xpose.msra.mxu0 0.0
    %110 = vmatpush.xpose.msra.mxu0 0.0
    %111 = vmatpush.xpose.msra.mxu0 0.0
    %112 = vmatpush.xpose.msra.mxu0 0.0
    %113 = vmatpush.xpose.msra.mxu0 %v96
    %114 = vmatmul.f32.gmra.mxu0 %v93
    %v115 = vpop.f32.mrf.mxu0
    %v116 = vadd.f32 0.0, %v115
    %117 = vdwg.mxu0
    %v118 = vmul.f32 %v55, %v55
    %v119 = vmul.f32 %v56, %v56
    %v120 = vsel %vm65, %v118, 0.0
    %121 = vadd.xlane.f32.xlu0 %v120
    %v122 = vpop.xlane.xlu0 %121
    %v123 = vsel %vm65, %v119, 0.0
    %124 = vadd.xlane.f32.xlu0 %v123
    %v125 = vpop.xlane.xlu0 %124
    %v126 = vmul.f32 %v53, %v53
    %v127 = vmul.f32 %v54, %v54
    %v129 = vsel %vm65, 1.0, 0
    %v132 = vsel %vm65, %v126, 0
    %134 = vmatpush.xpose.msra.mxu0 0.0
    %135 = vmatpush.xpose.msra.mxu0 0.0
    %136 = vmatpush.xpose.msra.mxu0 0.0
    %137 = vmatpush.xpose.msra.mxu0 0.0
    %138 = vmatpush.xpose.msra.mxu0 0.0
    %139 = vmatpush.xpose.msra.mxu0 0.0
    %140 = vmatpush.xpose.msra.mxu0 0.0
    %141 = vmatpush.xpose.msra.mxu0 0.0
    %142 = vmatpush.xpose.msra.mxu0 0.0
    %143 = vmatpush.xpose.msra.mxu0 0.0
    %144 = vmatpush.xpose.msra.mxu0 0.0
    %145 = vmatpush.xpose.msra.mxu0 0.0
    %146 = vmatpush.xpose.msra.mxu0 0.0
    %147 = vmatpush.xpose.msra.mxu0 0.0
    %148 = vmatpush.xpose.msra.mxu0 0.0
    %149 = vmatpush.xpose.msra.mxu0 %v132
    %150 = vmatmul.f32.gmra.mxu0 %v129
    %v151 = vpop.f32.mrf.mxu0
    %v152 = vadd.f32 0.0, %v151
    %153 = vdwg.mxu0
    %v155 = vsel %vm65, %v127, 0
    %157 = vmatpush.xpose.msra.mxu0 0.0
    %158 = vmatpush.xpose.msra.mxu0 0.0
    %159 = vmatpush.xpose.msra.mxu0 0.0
    %160 = vmatpush.xpose.msra.mxu0 0.0
    %161 = vmatpush.xpose.msra.mxu0 0.0
    %162 = vmatpush.xpose.msra.mxu0 0.0
    %163 = vmatpush.xpose.msra.mxu0 0.0
    %164 = vmatpush.xpose.msra.mxu0 0.0
    %165 = vmatpush.xpose.msra.mxu0 0.0
    %166 = vmatpush.xpose.msra.mxu0 0.0
    %167 = vmatpush.xpose.msra.mxu0 0.0
    %168 = vmatpush.xpose.msra.mxu0 0.0
    %169 = vmatpush.xpose.msra.mxu0 0.0
    %170 = vmatpush.xpose.msra.mxu0 0.0
    %171 = vmatpush.xpose.msra.mxu0 0.0
    %172 = vmatpush.xpose.msra.mxu0 %v155
    %173 = vmatmul.f32.gmra.mxu0 %v129
    %v174 = vpop.f32.mrf.mxu0
    %v175 = vadd.f32 0.0, %v174
    %176 = vdwg.mxu0
    %v177 = vperm.slane %v152, 0
    %v178 = vperm.slane %v175, 0
    %v179 = vadd.f32 %v122, %v177
    %v180 = vadd.f32 %v125, %v178
    %v181 = vmul.f32 %v90, 2.0
    %v182 = vmul.f32 %v116, 2.0
    %v183 = vsub.f32 %v179, %v181
    %v184 = vsub.f32 %v180, %v182
    %v185 = vmax.f32 %v183, 0.0
    %v186 = vmax.f32 %v184, 0.0
    %v187 = vrsqrt.pop %v185
    %v188 = vmul.f32 %v187, %v185
    %v189 = vmul.f32 %v188, %v187
    %v190 = vmul.f32 0.5, %v189
    %v191 = vsub.f32 1.5, %v190
    %v192 = vmul.f32 %v187, %v191
    %v193 = vmul.f32 %v185, %v192
    %vm194 = vcmp.eq.f32.partialorder %v185, inf
    %v195 = vsel %vm194, %v185, %v193
    %vm196 = vcmp.eq.f32.partialorder %v185, 0.0
    %v197 = vand.u32 %v185, 2147483648
    %v198 = vsel %vm196, %v197, %v195
    %v199 = vrsqrt.pop %v186
    %v200 = vmul.f32 %v199, %v186
    %v201 = vmul.f32 %v200, %v199
    %v202 = vmul.f32 0.5, %v201
    %v203 = vsub.f32 1.5, %v202
    %v204 = vmul.f32 %v199, %v203
    %v205 = vmul.f32 %v186, %v204
    %vm206 = vcmp.eq.f32.partialorder %v186, inf
    %v207 = vsel %vm206, %v186, %v205
    %vm208 = vcmp.eq.f32.partialorder %v186, 0.0
    %v209 = vand.u32 %v186, 2147483648
    %v210 = vsel %vm208, %v209, %v207
    %211 = vmatpush.msra.mxu0 0.0
    %212 = vmatpush.msra.mxu0 0.0
    %213 = vmatpush.msra.mxu0 0.0
    %214 = vmatpush.msra.mxu0 0.0
    %215 = vmatpush.msra.mxu0 0.0
    %216 = vmatpush.msra.mxu0 0.0
    %217 = vmatpush.msra.mxu0 0.0
    %218 = vmatpush.msra.mxu0 0.0
    %219 = vmatpush.msra.mxu0 0.0
    %220 = vmatpush.msra.mxu0 0.0
    %221 = vmatpush.msra.mxu0 0.0
    %222 = vmatpush.msra.mxu0 0.0
    %223 = vmatpush.msra.mxu0 %v64
    %224 = vmatpush.msra.mxu0 %v63
    %225 = vmatpush.msra.mxu0 %v62
    %226 = vmatpush.msra.mxu0 %v61
    %227 = vmatmul.f32.gmra.mxu0 %v67
    %v228 = vpop.f32.mrf.mxu0
    %v229 = vadd.f32 0.0, %v228
    %230 = vdwg.mxu0
    %231 = vmatpush.msra.mxu0 0.0
    %232 = vmatpush.msra.mxu0 0.0
    %233 = vmatpush.msra.mxu0 0.0
    %234 = vmatpush.msra.mxu0 0.0
    %235 = vmatpush.msra.mxu0 0.0
    %236 = vmatpush.msra.mxu0 0.0
    %237 = vmatpush.msra.mxu0 0.0
    %238 = vmatpush.msra.mxu0 0.0
    %239 = vmatpush.msra.mxu0 0.0
    %240 = vmatpush.msra.mxu0 0.0
    %241 = vmatpush.msra.mxu0 0.0
    %242 = vmatpush.msra.mxu0 0.0
    %243 = vmatpush.msra.mxu0 %v64
    %244 = vmatpush.msra.mxu0 %v63
    %245 = vmatpush.msra.mxu0 %v62
    %246 = vmatpush.msra.mxu0 %v61
    %247 = vmatmul.f32.gmra.mxu0 %v93
    %v248 = vpop.f32.mrf.mxu0
    %v249 = vadd.f32 0.0, %v248
    %250 = vdwg.mxu0
    %v252 = vsel %vm65, %v229, 0
    %254 = vmatpush.xpose.msra.mxu0 0.0
    %255 = vmatpush.xpose.msra.mxu0 0.0
    %256 = vmatpush.xpose.msra.mxu0 0.0
    %257 = vmatpush.xpose.msra.mxu0 0.0
    %258 = vmatpush.xpose.msra.mxu0 0.0
    %259 = vmatpush.xpose.msra.mxu0 0.0
    %260 = vmatpush.xpose.msra.mxu0 0.0
    %261 = vmatpush.xpose.msra.mxu0 0.0
    %262 = vmatpush.xpose.msra.mxu0 0.0
    %263 = vmatpush.xpose.msra.mxu0 0.0
    %264 = vmatpush.xpose.msra.mxu0 0.0
    %265 = vmatpush.xpose.msra.mxu0 0.0
    %266 = vmatpush.xpose.msra.mxu0 0.0
    %267 = vmatpush.xpose.msra.mxu0 0.0
    %268 = vmatpush.xpose.msra.mxu0 0.0
    %269 = vmatpush.xpose.msra.mxu0 %v70
    %270 = vmatmul.f32.gmra.mxu0 %v252
    %v271 = vpop.f32.mrf.mxu0
    %v272 = vadd.f32 0.0, %v271
    %273 = vdwg.mxu0
    %v275 = vsel %vm65, %v249, 0
    %277 = vmatpush.xpose.msra.mxu0 0.0
    %278 = vmatpush.xpose.msra.mxu0 0.0
    %279 = vmatpush.xpose.msra.mxu0 0.0
    %280 = vmatpush.xpose.msra.mxu0 0.0
    %281 = vmatpush.xpose.msra.mxu0 0.0
    %282 = vmatpush.xpose.msra.mxu0 0.0
    %283 = vmatpush.xpose.msra.mxu0 0.0
    %284 = vmatpush.xpose.msra.mxu0 0.0
    %285 = vmatpush.xpose.msra.mxu0 0.0
    %286 = vmatpush.xpose.msra.mxu0 0.0
    %287 = vmatpush.xpose.msra.mxu0 0.0
    %288 = vmatpush.xpose.msra.mxu0 0.0
    %289 = vmatpush.xpose.msra.mxu0 0.0
    %290 = vmatpush.xpose.msra.mxu0 0.0
    %291 = vmatpush.xpose.msra.mxu0 0.0
    %292 = vmatpush.xpose.msra.mxu0 %v96
    %293 = vmatmul.f32.gmra.mxu0 %v275
    %v294 = vpop.f32.mrf.mxu0
    %v295 = vadd.f32 0.0, %v294
    %296 = vdwg.mxu0
    %298 = vset.pattern.permute.xlu0 0
    %299 = vperm.xlu0 %298, %v59
    %v300 = vpop.permute.xlu0 %299
    %303 = vset.pattern.permute.xlu0 0
    %304 = vperm.xlu0 %303, %v60
    %v305 = vpop.permute.xlu0 %304
    %v309 = vperm.slane %v57, 0
    %v310 = vperm.slane %v58, 0
    %v313 = vmul.f32 %v300, %v309
    %v314 = vmul.f32 %v305, %v310
    %vm315 = vcmp.eq.f32.partialorder %v313, 0.0
    %vm316 = vcmp.eq.f32.partialorder %v314, 0.0
    %v317 = vsel %vm315, -1e+10, %v272
    %v318 = vsel %vm316, -1e+10, %v295
    %vm319 = vcmask 64512
    %v320 = vsel %vm319, %v317, -inf
    %321 = vmax.xlane.f32.xlu0 %v320
    %v322 = vpop.xlane.xlu0 %321
    %v323 = vsel %vm319, %v318, -inf
    %324 = vmax.xlane.f32.xlu0 %v323
    %v325 = vpop.xlane.xlu0 %324
    %v326 = vsub.f32 %v317, %v322
    %v327 = vsub.f32 %v318, %v325
    %v328 = vmul.f32 %v326, 1.442695
    %v329 = vpow.pop %v328
    %v330 = vmul.f32 %v327, 1.442695
    %v331 = vpow.pop %v330
    %v332 = vsel %vm319, %v329, 0.0
    %333 = vadd.xlane.f32.xlu0 %v332
    %v334 = vpop.xlane.xlu0 %333
    %v335 = vsel %vm319, %v331, 0.0
    %336 = vadd.xlane.f32.xlu0 %v335
    %v337 = vpop.xlane.xlu0 %336
    %v338 = vmul.f32 %v329, %v198
    %v339 = vmul.f32 %v331, %v210
    %v340 = vsel %vm319, %v338, 0.0
    %341 = vadd.xlane.f32.xlu0 %v340
    %v342 = vpop.xlane.xlu0 %341
    %v343 = vsel %vm319, %v339, 0.0
    %344 = vadd.xlane.f32.xlu0 %v343
    %v345 = vpop.xlane.xlu0 %344
    %v346 = vrcp.pop %v334
    %v347 = vrcp.pop %v337
    %v348 = vmul.f32 %v342, %v346
    %v349 = vmul.f32 %v345, %v347
    %v350 = vrot.slane %v348, 4
    %v351 = vadd.f32 %v348, %v350
    %v352 = vrot.slane %v351, 2
    %v353 = vadd.f32 %v351, %v352
    %v354 = vrot.slane %v353, 1
    %v355 = vadd.f32 %v353, %v354
    %v356 = vrot.slane %v349, 4
    %v357 = vadd.f32 %v349, %v356
    %v358 = vrot.slane %v357, 2
    %v359 = vadd.f32 %v357, %v358
    %v360 = vrot.slane %v359, 1
    %v361 = vadd.f32 %v359, %v360
    %362 = vst [vmem:[#allocation7] sm:$0x1] %v355
    %363 = vst [vmem:[#allocation7 + $0x1] sm:$0x1] %v361
    // Predicated region
    $region30: #{tpu_custom_call.1} parent=1 // pred_check
      _
    $region31: #{tpu_custom_call.1} parent=1 // pred_check_branch
      %365 = sbr.rel (0) target = $region33
    $region32: #{tpu_custom_call.1} parent=1 // pred_region
      %367 = vsyncadd [#allocation4], 0
      %s368 = sshll.u32 [#allocation7], 4
      %s369 = int_to_ptr.vmem [resolvable:$true] %s368
      %s370 = sshll.u32 %s5, 4
      %s371 = int_to_ptr.hbm [resolvable:$true] %s370
      %376 = dma.vmem_to_hbm [thread:$0]  %s369, 32, %s371, [#allocation4], 16, 16, 1
    $region33: #{tpu_custom_call.1} parent=1 // pred_fallthru
      _
    // Predicated region
    $region34: #{tpu_custom_call.1} parent=1 // pred_check
      _
    $region35: #{tpu_custom_call.1} parent=1 // pred_check_branch
      %378 = sbr.rel (0) target = $region37
    $region36: #{tpu_custom_call.1} parent=1 // pred_region
      %380 = dma.done [#allocation4], 32
    $region37: #{tpu_custom_call.1} parent=1 // pred_fallthru
      _
    %381 = vsyncpa [#allocation3], 1
    %382 = vsyncpa [#allocation6], 1
    %383 = vsyncpa [#allocation4], 1

</llo_original>
